<compile_context>
chip_gen: v7x
topology: tpu7x:2x2x1
jax: 0.10.0
libtpu: 0.0.40
codegen_flags: <defaults>
</compile_context>

<pallas_src>
import functools

import jax
import jax.numpy as jnp
from jax import lax
from jax.experimental import pallas as pl
from jax.experimental.pallas import tpu as pltpu


def _mlp_layer_kernel(x_ref, w_ref, b_ref, o_ref, *, tanh_dtype):
    """One output tile: tanh(x @ W^T + b) with no accumulator scratch.

    x_ref: [TB, H]   (compute dtype)
    w_ref: [TN, H]   PyTorch [out, in] layout -- contraction over the last dim of
                     both operands, so no transpose is ever materialized.
    b_ref: [1, TN]   float32
    o_ref: [TB, TN]
    """
    y = lax.dot_general(
        x_ref[...], w_ref[...],
        dimension_numbers=(((1,), (1,)), ((), ())),
        preferred_element_type=jnp.float32,
    )
    y = y + b_ref[...]                                   # f32 bias add on the VPU
    o_ref[...] = jnp.tanh(y.astype(tanh_dtype)).astype(o_ref.dtype)


def _device_kind():
    try:
        return jax.devices()[0].device_kind.lower()
    except Exception:
        return ""


def _vmem_capacity_bytes():
    try:
        return int(pltpu.get_tpu_info().vmem_capacity_bytes)
    except Exception:
        return (64 << 20) if "v7" in _device_kind() else (128 << 20)


def _supports_bf16_eup():
    # v5e/v5p have no bf16 VPU/EUP path; keep the tanh epilogue in f32 there.
    return "v5" not in _device_kind()


def _pick_n_tile(h):
    """Weight-strip height for the streamed path.  Prefer 256-aligned tiles
    (2x256x256 MXU on v6e/v7x); 128-aligned still feeds v5e's 128x128 MXUs."""
    for cand in (512, 256, 384, 128):
        if h % cand == 0:
            return cand
    return h  # awkward H: full-extent strip (always legal; costs extra VMEM)


def mlp_layer(features, weight, bias, *, block_b=512, block_n=None,
              compute_dtype=jnp.bfloat16):
    """tanh(features @ weight.T + bias), weight in PyTorch [out, in] layout.

    `compute_dtype` is the MXU operand dtype (accumulation is always f32, so bf16
    stays within typical bf16 tolerance of the f32 PyTorch reference).  For the best
    HBM bandwidth, store `weight` pre-cast to `compute_dtype` so no per-call cast
    traffic is generated.  Pass compute_dtype=None to keep input dtypes as-is.
    """
    B, H = features.shape
    assert weight.shape == (H, H), "weight must be [hidden, hidden]"
    assert bias.shape == (H,), "bias must be [hidden]"

    out_dtype = features.dtype

    if compute_dtype is not None:
        compute_dtype = jnp.dtype(compute_dtype)
        if features.dtype != compute_dtype:
            features = features.astype(compute_dtype)
        if weight.dtype != compute_dtype:
            # NOTE: in production, pre-cast the parameter once at init instead of here.
            weight = weight.astype(compute_dtype)

    bias2d = bias.reshape(1, H).astype(jnp.float32)

    x_item = jnp.dtype(features.dtype).itemsize
    w_item = jnp.dtype(weight.dtype).itemsize
    o_item = jnp.dtype(out_dtype).itemsize

    # ---- batch tile ----------------------------------------------------------
    tb = min(block_b, B)
    if tb < B:
        tb = max(8, (tb // 8) * 8)          # partial batch blocks need sublane alignment

    # ---- path selection: resident weight vs streamed N-strips -----------------
    vmem_cap = _vmem_capacity_bytes()
    est_resident = (2 * tb * H * x_item       # x (double-buffered)
                    + H * H * w_item          # resident weight (single buffer)
                    + 8 * H * 4               # bias, sublane-padded (single buffer)
                    + 2 * tb * H * o_item)    # out (double-buffered)
    force_n_tiling = block_n is not None and block_n < H
    use_resident = (not force_n_tiling) and est_resident <= int(0.70 * vmem_cap)

    tanh_dtype = (jnp.dtype(out_dtype)
                  if (jnp.dtype(out_dtype) == jnp.bfloat16 and _supports_bf16_eup())
                  else jnp.float32)
    kernel = functools.partial(_mlp_layer_kernel, tanh_dtype=tanh_dtype)

    if use_resident:
        # Common SimCSE case: the whole [H, H] weight lives in VMEM once; only the
        # batch is tiled, so the weight is read from HBM exactly once.
        grid = (pl.cdiv(B, tb),)
        in_specs = [
            pl.BlockSpec((tb, H), lambda i: (i, 0)),                              # x tile
            pl.BlockSpec((H, H), lambda i: (0, 0), pipeline_mode=pl.Buffered(1)),  # W
            pl.BlockSpec((1, H), lambda i: (0, 0), pipeline_mode=pl.Buffered(1)),  # bias
        ]
        out_specs = pl.BlockSpec((tb, H), lambda i: (i, 0))
        dim_sems = ("parallel",)
        est = est_resident
    else:
        tn = block_n if block_n is not None else _pick_n_tile(H)
        if H % tn != 0 or (tn != H and tn % 128 != 0):
            raise ValueError("block_n must divide the hidden size and be a multiple "
                             "of 128 (or equal to it)")
        # n OUTERMOST, batch axis inner: the weight strip's block index is constant
        # across the inner batch axis, so each strip is fetched from HBM once total;
        # the (much smaller, B << H) x tile is the operand that gets re-read.
        grid = (H // tn, pl.cdiv(B, tb))
        in_specs = [
            pl.BlockSpec((tb, H), lambda n, i: (i, 0)),    # x tile (full K)
            pl.BlockSpec((tn, H), lambda n, i: (n, 0)),    # weight strip [out, in]
            pl.BlockSpec((1, tn), lambda n, i: (0, n)),    # bias strip
        ]
        out_specs = pl.BlockSpec((tb, tn), lambda n, i: (i, n))
        dim_sems = ("parallel", "parallel")
        est = (2 * tb * H * x_item + 2 * tn * H * w_item
               + 2 * 8 * tn * 4 + 2 * tb * tn * o_item)

    # ~75% of physical VMEM: headroom for Mosaic internal scratch on v7x (64 MiB
    # parts); no artificial 64 MiB clamp on the 128 MiB v5e/v6e parts.
    vmem_limit = int(min(max(int(1.5 * est), 32 << 20), int(0.75 * vmem_cap)))

    cost = pl.CostEstimate(
        flops=2 * B * H * H,
        transcendentals=B * H,
        bytes_accessed=B * H * x_item + H * H * w_item + H * 4 + B * H * o_item,
    )

    return pl.pallas_call(
        kernel,
        out_shape=jax.ShapeDtypeStruct((B, H), out_dtype),
        grid_spec=pltpu.PrefetchScalarGridSpec(
            num_scalar_prefetch=0,
            grid=grid,
            in_specs=in_specs,
            out_specs=out_specs,
        ),
        compiler_params=pltpu.CompilerParams(
            dimension_semantics=dim_sems,
            vmem_limit_bytes=vmem_limit,
        ),
        cost_estimate=cost,
    )(features, weight, bias2d)


if __name__ == "__main__":
    key = jax.random.PRNGKey(0)
    B, H = 16, 256
    k_x, k_w, k_b = jax.random.split(key, 3)
    bound = 1.0 / float(H) ** 0.5
    x = jax.random.normal(k_x, (B, H), dtype=jnp.float32)
    w = jax.random.uniform(k_w, (H, H), dtype=jnp.float32, minval=-bound, maxval=bound)
    b = jax.random.uniform(k_b, (H,), dtype=jnp.float32, minval=-bound, maxval=bound)

    ref = jnp.tanh(x @ w.T + b)

    # 1) Default path: bf16 MXU operands, f32 accumulation + f32 epilogue.  Weight is
    #    pre-cast once (as a real model would store the param) -> no per-call cast.
    w_bf16 = w.astype(jnp.bfloat16)
    out = mlp_layer(x, w_bf16, b)
    jax.block_until_ready(out)
    assert out.shape == (B, H) and out.dtype == x.dtype
    assert jnp.allclose(out, ref, atol=2e-2, rtol=2e-2), "bf16 path mismatch"

    # 2) Full-f32 path: bit-for-bit comparable to the PyTorch reference semantics.
    out_f32 = mlp_layer(x, w, b, compute_dtype=jnp.float32)
    jax.block_until_ready(out_f32)
    assert jnp.allclose(out_f32, ref, atol=1e-4, rtol=1e-4), "f32 path mismatch"

    # 3) Multi-step batch grid (exercises x/out double-buffering + edge masking).
    out_bt = mlp_layer(x, w, b, compute_dtype=jnp.float32, block_b=8)
    jax.block_until_ready(out_bt)
    assert jnp.allclose(out_bt, ref, atol=1e-4, rtol=1e-4), "batch-tiled mismatch"

    # 4) Force the streamed N-strip path (weight read once, n outermost, batch inner).
    out_nt = mlp_layer(x, w, b, compute_dtype=jnp.float32, block_b=8, block_n=128)
    jax.block_until_ready(out_nt)
    assert jnp.allclose(out_nt, ref, atol=1e-4, rtol=1e-4), "n-tiled mismatch"

    print("KERNEL_OK")
</pallas_src>

<mosaic_0001>
module attributes {stable_mosaic.version = 11 : i64} {
  func.func @_mlp_layer_kernel(%arg0: i32, %arg1: memref<16x256xbf16, #tpu.memory_space<vmem>>, %arg2: memref<256x256xbf16, #tpu.memory_space<vmem>>, %arg3: memref<1x256xf32, #tpu.memory_space<vmem>>, %arg4: memref<16x256xf32, #tpu.memory_space<vmem>>) attributes {dimension_semantics = [#tpu.dimension_semantics<parallel>], iteration_bounds = array<i64: 1>, scalar_prefetch = 0 : i64, scratch_operands = 0 : i64, tpu.core_type = #tpu.core_type<tc>, window_params = [{transform_indices = @transform_0, window_bounds = array<i64: 16, 256>}, {pipeline_mode = #tpu.pipeline_mode<synchronous>, transform_indices = @transform_1, window_bounds = array<i64: 256, 256>}, {pipeline_mode = #tpu.pipeline_mode<synchronous>, transform_indices = @transform_2, window_bounds = array<i64: 1, 256>}, {transform_indices = @transform_3, window_bounds = array<i64: 16, 256>}]} {
    %c0 = arith.constant 0 : index
    %c0_0 = arith.constant 0 : index
    %0 = vector.load %arg1[%c0, %c0_0] : memref<16x256xbf16, #tpu.memory_space<vmem>>, vector<16x256xbf16>
    %c0_1 = arith.constant 0 : index
    %c0_2 = arith.constant 0 : index
    %1 = vector.load %arg2[%c0_1, %c0_2] : memref<256x256xbf16, #tpu.memory_space<vmem>>, vector<256x256xbf16>
    %cst = arith.constant dense<0.000000e+00> : vector<16x256xf32>
    %2 = tpu.matmul %0, %1, %cst {dimension_numbers = #tpu.dot_dimension_numbers<[1], [1], [0], [0], [0, 0, 1, 0], [], []>} : vector<16x256xbf16>, vector<256x256xbf16>, vector<16x256xf32> -> vector<16x256xf32>
    %c0_3 = arith.constant 0 : index
    %c0_4 = arith.constant 0 : index
    %3 = vector.load %arg3[%c0_3, %c0_4] : memref<1x256xf32, #tpu.memory_space<vmem>>, vector<1x256xf32>
    %4 = vector.broadcast %3 : vector<1x256xf32> to vector<16x256xf32>
    %5 = arith.addf %2, %4 : vector<16x256xf32>
    %6 = math.tanh %5 : vector<16x256xf32>
    %c0_5 = arith.constant 0 : index
    %c0_6 = arith.constant 0 : index
    %7 = vector.load %arg4[%c0_5, %c0_6] : memref<16x256xf32, #tpu.memory_space<vmem>>, vector<16x256xf32>
    tpu.vector_store %arg4[%c0_5, %c0_6], %6 {strides = array<i32>} : memref<16x256xf32, #tpu.memory_space<vmem>>, vector<16x256xf32>,
    return
  }
  func.func @transform_0(%arg0: i32) -> (i32, i32) {
    %c0_i32 = arith.constant 0 : i32
    %c0_i32_0 = arith.constant 0 : i32
    return %arg0, %c0_i32 : i32, i32
  }
  func.func @transform_1(%arg0: i32) -> (i32, i32) {
    %c0_i32 = arith.constant 0 : i32
    %c0_i32_0 = arith.constant 0 : i32
    %c0_i32_1 = arith.constant 0 : i32
    return %c0_i32, %c0_i32_0 : i32, i32
  }
  func.func @transform_2(%arg0: i32) -> (i32, i32) {
    %c0_i32 = arith.constant 0 : i32
    %c0_i32_0 = arith.constant 0 : i32
    %c0_i32_1 = arith.constant 0 : i32
    return %c0_i32, %c0_i32_0 : i32, i32
  }
  func.func @transform_3(%arg0: i32) -> (i32, i32) {
    %c0_i32 = arith.constant 0 : i32
    %c0_i32_0 = arith.constant 0 : i32
    return %arg0, %c0_i32 : i32, i32
  }
}

</mosaic_0001>

<llo_original>
// kernel: tpu_custom_call.1
$region0: #{tpu_custom_call.1}
  #allocation0 [shape = 'u32[]', space=smem, size = 0x4, offset = 0x4, fixed_abs, tag = 'smem constant byte address 0x4 - core index']
  #allocation1 [shape = 'u32[144,128]{1,0:T(1,128)}', space=vmem, size = 0x12000, scoped, tag = 'internal scratch']
  %s0 = inlined_call_operand.hbm [shape: bf16[16,256], index: 0, kind: input, shape index: {}]
  %s1 = inlined_call_operand.hbm [shape: bf16[256,256], index: 1, kind: input, shape index: {}]
  %s2 = inlined_call_operand.vmem [shape: f32[1,256], index: 2, kind: input, shape index: {}]
  %s3 = inlined_call_operand.hbm [shape: f32[16,256], index: 3, kind: output, shape index: {}]
  %s4 = sld [smem:[#allocation0]]
  $region30: #{tpu_custom_call.1} parent=0
    _
  %s6 = ssub.s32 1, %s4
  %s7 = scalar_select 0, %s6, %s4
  $region1: #{tpu_custom_call.1} parent=0
    #allocation2 [shape = 'u8[8192]{0}', space=vmem, size = 0x2000, scoped, tag = 'input window, operand 0, single buffered']
    #allocation3 [shape = 's32[1]{0}', space=sflag, size = 0x4, scoped, tag = 'scoped memory for tpu_custom_call.1']
    #allocation4 [shape = 's32[1]{0}', space=sflag, size = 0x4, scoped, tag = 'scoped memory for tpu_custom_call.1']
    #allocation5 [shape = 'u8[131072]{0}', space=vmem, size = 0x20000, scoped, tag = 'input window, operand 1, single buffered']
    #allocation6 [shape = 's32[1]{0}', space=sflag, size = 0x4, scoped, tag = 'scoped memory for tpu_custom_call.1']
    #allocation7 [shape = 'u8[16384]{0}', space=vmem, size = 0x4000, scoped, tag = 'output window, operand 0, single buffered']
    %8 = vsyncpa [#allocation3], 0
    %9 = vsyncpa [#allocation6], 0
    %10 = vsyncpa [#allocation4], 0
    // Predicated region
    $region2: #{tpu_custom_call.1} parent=1 // pred_check
      _
    $region3: #{tpu_custom_call.1} parent=1 // pred_check_branch
      %12 = sbr.rel (0) target = $region5
    $region4: #{tpu_custom_call.1} parent=1 // pred_region
      %s14 = ssub.s32 256, 256
      %15 = vsyncadd [#allocation3], %s14
      %s16 = sshll.u32 [#allocation2], 4
      %s17 = int_to_ptr.vmem [resolvable:$true] %s16
      %22 = dma.hbm_to_vmem [thread:$0]  %s0, 256, %s17, [#allocation3], 128, 128, 8
    $region5: #{tpu_custom_call.1} parent=1 // pred_fallthru
      _
    // Predicated region
    $region6: #{tpu_custom_call.1} parent=1 // pred_check
      _
    $region7: #{tpu_custom_call.1} parent=1 // pred_check_branch
      %24 = sbr.rel (0) target = $region9
    $region8: #{tpu_custom_call.1} parent=1 // pred_region
      %s26 = ssub.s32 4096, 4096
      %27 = vsyncadd [#allocation6], %s26
      %s28 = sshll.u32 [#allocation5], 4
      %s29 = int_to_ptr.vmem [resolvable:$true] %s28
      %34 = dma.hbm_to_vmem [thread:$0]  %s1, 4096, %s29, [#allocation6], 128, 128, 8
    $region9: #{tpu_custom_call.1} parent=1 // pred_fallthru
      _
    // Predicated region
    $region10: #{tpu_custom_call.1} parent=1 // pred_check
      _
    $region11: #{tpu_custom_call.1} parent=1 // pred_check_branch
      %36 = sbr.rel (0) target = $region13
    $region12: #{tpu_custom_call.1} parent=1 // pred_region
      _
    $region13: #{tpu_custom_call.1} parent=1 // pred_fallthru
      _
    // Predicated region
    $region14: #{tpu_custom_call.1} parent=1 // pred_check
      _
    $region15: #{tpu_custom_call.1} parent=1 // pred_check_branch
      %38 = sbr.rel (0) target = $region17
    $region16: #{tpu_custom_call.1} parent=1 // pred_region
      %39 = dma.done [#allocation3], 256
    $region17: #{tpu_custom_call.1} parent=1 // pred_fallthru
      _
    // Predicated region
    $region18: #{tpu_custom_call.1} parent=1 // pred_check
      _
    $region19: #{tpu_custom_call.1} parent=1 // pred_check_branch
      %41 = sbr.rel (0) target = $region21
    $region20: #{tpu_custom_call.1} parent=1 // pred_region
      %42 = dma.done [#allocation6], 4096
    $region21: #{tpu_custom_call.1} parent=1 // pred_fallthru
      _
    %v43 = vld [vmem:[#allocation2] sm:$0xff]
    %v44 = vld [vmem:[#allocation2 + $0x8] sm:$0xff]
    %v45 = vld [vmem:[#allocation5] sm:$0xff]
    %v46 = vld [vmem:[#allocation5 + $0x8] sm:$0xff]
    %v47 = vld [vmem:[#allocation5 + $0x10] sm:$0xff]
    %v48 = vld [vmem:[#allocation5 + $0x18] sm:$0xff]
    %v49 = vld [vmem:[#allocation5 + $0x20] sm:$0xff]
    %v50 = vld [vmem:[#allocation5 + $0x28] sm:$0xff]
    %v51 = vld [vmem:[#allocation5 + $0x30] sm:$0xff]
    %v52 = vld [vmem:[#allocation5 + $0x38] sm:$0xff]
    %v53 = vld [vmem:[#allocation5 + $0x40] sm:$0xff]
    %v54 = vld [vmem:[#allocation5 + $0x48] sm:$0xff]
    %v55 = vld [vmem:[#allocation5 + $0x50] sm:$0xff]
    %v56 = vld [vmem:[#allocation5 + $0x58] sm:$0xff]
    %v57 = vld [vmem:[#allocation5 + $0x60] sm:$0xff]
    %v58 = vld [vmem:[#allocation5 + $0x68] sm:$0xff]
    %v59 = vld [vmem:[#allocation5 + $0x70] sm:$0xff]
    %v60 = vld [vmem:[#allocation5 + $0x78] sm:$0xff]
    %v61 = vld [vmem:[#allocation5 + $0x80] sm:$0xff]
    %v62 = vld [vmem:[#allocation5 + $0x88] sm:$0xff]
    %v63 = vld [vmem:[#allocation5 + $0x90] sm:$0xff]
    %v64 = vld [vmem:[#allocation5 + $0x98] sm:$0xff]
    %v65 = vld [vmem:[#allocation5 + $0xa0] sm:$0xff]
    %v66 = vld [vmem:[#allocation5 + $0xa8] sm:$0xff]
    %v67 = vld [vmem:[#allocation5 + $0xb0] sm:$0xff]
    %v68 = vld [vmem:[#allocation5 + $0xb8] sm:$0xff]
    %v69 = vld [vmem:[#allocation5 + $0xc0] sm:$0xff]
    %v70 = vld [vmem:[#allocation5 + $0xc8] sm:$0xff]
    %v71 = vld [vmem:[#allocation5 + $0xd0] sm:$0xff]
    %v72 = vld [vmem:[#allocation5 + $0xd8] sm:$0xff]
    %v73 = vld [vmem:[#allocation5 + $0xe0] sm:$0xff]
    %v74 = vld [vmem:[#allocation5 + $0xe8] sm:$0xff]
    %v75 = vld [vmem:[#allocation5 + $0xf0] sm:$0xff]
    %v76 = vld [vmem:[#allocation5 + $0xf8] sm:$0xff]
    %v77 = vld [vmem:[%s2] sm:$0x3]
    %v79 = vlaneseq
    %v80 = vshrl.u32 %v79, 7
    %v81 = vsub.s32 0, %v80
    %v82 = vrot.slane %v77, %v81
    %v83 = vlaneseq
    %v84 = vshrl.u32 %v83, 7
    %v85 = vsub.s32 1, %v84
    %v86 = vrot.slane %v77, %v85
    %v91 = vunpack.c.l.b16 %v43
    %v92 = vunpack.c.h.b16 %v43
    %v93 = vunpack.c.l.b16 %v44
    %v94 = vunpack.c.h.b16 %v44
    %v95 = vpack.c.b16 %v93, %v91
    %v96 = vpack.c.b16 %v94, %v92
    %v131 = vunpack.c.l.b16 %v45
    %v132 = vunpack.c.h.b16 %v45
    %v133 = vunpack.c.l.b16 %v46
    %v134 = vunpack.c.h.b16 %v46
    %v135 = vunpack.c.l.b16 %v47
    %v136 = vunpack.c.h.b16 %v47
    %v137 = vunpack.c.l.b16 %v48
    %v138 = vunpack.c.h.b16 %v48
    %v139 = vunpack.c.l.b16 %v49
    %v140 = vunpack.c.h.b16 %v49
    %v141 = vunpack.c.l.b16 %v50
    %v142 = vunpack.c.h.b16 %v50
    %v143 = vunpack.c.l.b16 %v51
    %v144 = vunpack.c.h.b16 %v51
    %v145 = vunpack.c.l.b16 %v52
    %v146 = vunpack.c.h.b16 %v52
    %v147 = vunpack.c.l.b16 %v53
    %v148 = vunpack.c.h.b16 %v53
    %v149 = vunpack.c.l.b16 %v54
    %v150 = vunpack.c.h.b16 %v54
    %v151 = vunpack.c.l.b16 %v55
    %v152 = vunpack.c.h.b16 %v55
    %v153 = vunpack.c.l.b16 %v56
    %v154 = vunpack.c.h.b16 %v56
    %v155 = vunpack.c.l.b16 %v57
    %v156 = vunpack.c.h.b16 %v57
    %v157 = vunpack.c.l.b16 %v58
    %v158 = vunpack.c.h.b16 %v58
    %v159 = vunpack.c.l.b16 %v59
    %v160 = vunpack.c.h.b16 %v59
    %v161 = vunpack.c.l.b16 %v60
    %v162 = vunpack.c.h.b16 %v60
    %v163 = vunpack.c.l.b16 %v61
    %v164 = vunpack.c.h.b16 %v61
    %v165 = vunpack.c.l.b16 %v62
    %v166 = vunpack.c.h.b16 %v62
    %v167 = vunpack.c.l.b16 %v63
    %v168 = vunpack.c.h.b16 %v63
    %v169 = vunpack.c.l.b16 %v64
    %v170 = vunpack.c.h.b16 %v64
    %v171 = vunpack.c.l.b16 %v65
    %v172 = vunpack.c.h.b16 %v65
    %v173 = vunpack.c.l.b16 %v66
    %v174 = vunpack.c.h.b16 %v66
    %v175 = vunpack.c.l.b16 %v67
    %v176 = vunpack.c.h.b16 %v67
    %v177 = vunpack.c.l.b16 %v68
    %v178 = vunpack.c.h.b16 %v68
    %v179 = vunpack.c.l.b16 %v69
    %v180 = vunpack.c.h.b16 %v69
    %v181 = vunpack.c.l.b16 %v70
    %v182 = vunpack.c.h.b16 %v70
    %v183 = vunpack.c.l.b16 %v71
    %v184 = vunpack.c.h.b16 %v71
    %v185 = vunpack.c.l.b16 %v72
    %v186 = vunpack.c.h.b16 %v72
    %v187 = vunpack.c.l.b16 %v73
    %v188 = vunpack.c.h.b16 %v73
    %v189 = vunpack.c.l.b16 %v74
    %v190 = vunpack.c.h.b16 %v74
    %v191 = vunpack.c.l.b16 %v75
    %v192 = vunpack.c.h.b16 %v75
    %v193 = vunpack.c.l.b16 %v76
    %v194 = vunpack.c.h.b16 %v76
    %v195 = vpack.c.b16 %v133, %v131
    %v196 = vpack.c.b16 %v134, %v132
    %v197 = vpack.c.b16 %v137, %v135
    %v198 = vpack.c.b16 %v138, %v136
    %v199 = vpack.c.b16 %v141, %v139
    %v200 = vpack.c.b16 %v142, %v140
    %v201 = vpack.c.b16 %v145, %v143
    %v202 = vpack.c.b16 %v146, %v144
    %v203 = vpack.c.b16 %v149, %v147
    %v204 = vpack.c.b16 %v150, %v148
    %v205 = vpack.c.b16 %v153, %v151
    %v206 = vpack.c.b16 %v154, %v152
    %v207 = vpack.c.b16 %v157, %v155
    %v208 = vpack.c.b16 %v158, %v156
    %v209 = vpack.c.b16 %v161, %v159
    %v210 = vpack.c.b16 %v162, %v160
    %v211 = vpack.c.b16 %v165, %v163
    %v212 = vpack.c.b16 %v166, %v164
    %v213 = vpack.c.b16 %v169, %v167
    %v214 = vpack.c.b16 %v170, %v168
    %v215 = vpack.c.b16 %v173, %v171
    %v216 = vpack.c.b16 %v174, %v172
    %v217 = vpack.c.b16 %v177, %v175
    %v218 = vpack.c.b16 %v178, %v176
    %v219 = vpack.c.b16 %v181, %v179
    %v220 = vpack.c.b16 %v182, %v180
    %v221 = vpack.c.b16 %v185, %v183
    %v222 = vpack.c.b16 %v186, %v184
    %v223 = vpack.c.b16 %v189, %v187
    %v224 = vpack.c.b16 %v190, %v188
    %v225 = vpack.c.b16 %v193, %v191
    %v226 = vpack.c.b16 %v194, %v192
    %259 = vmatprep.subr.bf16.mxu0 %v196
    %260 = vmatpush1.bf16.xpose.msra.mxu0 %v195
    %261 = vmatprep.subr.bf16.mxu0 %v198
    %262 = vmatpush1.bf16.xpose.msra.mxu0 %v197
    %263 = vmatprep.subr.bf16.mxu0 %v200
    %264 = vmatpush1.bf16.xpose.msra.mxu0 %v199
    %265 = vmatprep.subr.bf16.mxu0 %v202
    %266 = vmatpush1.bf16.xpose.msra.mxu0 %v201
    %267 = vmatprep.subr.bf16.mxu0 %v204
    %268 = vmatpush1.bf16.xpose.msra.mxu0 %v203
    %269 = vmatprep.subr.bf16.mxu0 %v206
    %270 = vmatpush1.bf16.xpose.msra.mxu0 %v205
    %271 = vmatprep.subr.bf16.mxu0 %v208
    %272 = vmatpush1.bf16.xpose.msra.mxu0 %v207
    %273 = vmatprep.subr.bf16.mxu0 %v210
    %274 = vmatpush1.bf16.xpose.msra.mxu0 %v209
    %275 = vmatprep.subr.bf16.mxu0 %v212
    %276 = vmatpush1.bf16.xpose.msra.mxu0 %v211
    %277 = vmatprep.subr.bf16.mxu0 %v214
    %278 = vmatpush1.bf16.xpose.msra.mxu0 %v213
    %279 = vmatprep.subr.bf16.mxu0 %v216
    %280 = vmatpush1.bf16.xpose.msra.mxu0 %v215
    %281 = vmatprep.subr.bf16.mxu0 %v218
    %282 = vmatpush1.bf16.xpose.msra.mxu0 %v217
    %283 = vmatprep.subr.bf16.mxu0 %v220
    %284 = vmatpush1.bf16.xpose.msra.mxu0 %v219
    %285 = vmatprep.subr.bf16.mxu0 %v222
    %286 = vmatpush1.bf16.xpose.msra.mxu0 %v221
    %287 = vmatprep.subr.bf16.mxu0 %v224
    %288 = vmatpush1.bf16.xpose.msra.mxu0 %v223
    %289 = vmatprep.subr.bf16.mxu0 %v226
    %290 = vmatpush1.bf16.xpose.msra.mxu0 %v225
    %291 = vmatprep.mubr.bf16.mxu0 %v96
    %292 = vmatmul.mubr.bf16.gmra.mrb[0].mxu0 %v95
    %v293 = vpop.f32.mrb[0].mxu0
    %v294 = vadd.f32 %v82, %v293
    %v295 = vpop.f32.mrb[0].mxu0
    %v296 = vadd.f32 %v86, %v295
    %v297 = vpop.f32.mrb[0].mxu0
    %v298 = vadd.f32 %v82, %v297
    %v299 = vpop.f32.mrb[0].mxu0
    %v300 = vadd.f32 %v86, %v299
    %301 = vdwg.mxu0
    %v302 = vtanh.pop %v294
    %v303 = vtanh.pop %v296
    %v304 = vtanh.pop %v298
    %v305 = vtanh.pop %v300
    %306 = vst [vmem:[#allocation7] sm:$0xff] %v302
    %307 = vst [vmem:[#allocation7 + $0x8] sm:$0xff] %v303
    %308 = vst [vmem:[#allocation7 + $0x10] sm:$0xff] %v304
    %309 = vst [vmem:[#allocation7 + $0x18] sm:$0xff] %v305
    // Predicated region
    $region22: #{tpu_custom_call.1} parent=1 // pred_check
      _
    $region23: #{tpu_custom_call.1} parent=1 // pred_check_branch
      %311 = sbr.rel (0) target = $region25
    $region24: #{tpu_custom_call.1} parent=1 // pred_region
      %s313 = ssub.s32 512, 512
      %314 = vsyncadd [#allocation4], %s313
      %s315 = sshll.u32 [#allocation7], 4
      %s316 = int_to_ptr.vmem [resolvable:$true] %s315
      %321 = dma.vmem_to_hbm [thread:$0]  %s316, 512, %s3, [#allocation4], 256, 256, 16
    $region25: #{tpu_custom_call.1} parent=1 // pred_fallthru
      _
    // Predicated region
    $region26: #{tpu_custom_call.1} parent=1 // pred_check
      _
    $region27: #{tpu_custom_call.1} parent=1 // pred_check_branch
      %323 = sbr.rel (0) target = $region29
    $region28: #{tpu_custom_call.1} parent=1 // pred_region
      %324 = dma.done [#allocation4], 512
    $region29: #{tpu_custom_call.1} parent=1 // pred_fallthru
      _
    %325 = vsyncpa [#allocation3], 1
    %326 = vsyncpa [#allocation6], 1
    %327 = vsyncpa [#allocation4], 1

</llo_original>
